<compile_context>
chip_gen: v6e
topology: v6e:2x2x1
jax: 0.10.0
libtpu: 0.0.40
codegen_flags: <defaults>
</compile_context>

<pallas_src>
from functools import partial

import jax
import jax.numpy as jnp
from jax.experimental import pallas as pl
from jax.experimental.pallas import tpu as pltpu


EMBED_DIM = 32
HIDDEN_DIM = 128


def _round_up(x, m):
    return ((x + m - 1) // m) * m


def rnn_kernel(tok_ref, table_ref, whh_ref, wout_ref, bout_ref, o_ref):
    """Fused embedding-gather + T-step tanh recurrence + output projection.

    tok_ref:   SMEM (B, T) int32   token ids
    table_ref: VMEM (Vrow, 128)    precomposed  embed @ W_ih^T + b_ih + b_hh
    whh_ref:   VMEM (128, 128)     W_hh^T
    wout_ref:  VMEM (128, VPAD)    W_out^T zero-padded to a 128-lane multiple
    bout_ref:  VMEM (1, VPAD)      b_out zero-padded
    o_ref:     VMEM (B*T, VPAD)    logits, batch-major rows, lane-dense
    """
    B, T = tok_ref.shape
    H = whh_ref.shape[0]

    # Gather the precomposed input-projection rows for every (b, t) up front —
    # off the serial critical path.  Each x_t is its own (B, H) value.
    xs = []
    for t in range(T):
        rows = [table_ref[pl.ds(tok_ref[b, t], 1), :] for b in range(B)]
        xs.append(jnp.concatenate(rows, axis=0))          # (B, H)

    whh = whh_ref[...]

    # Serial recurrence.  h0 == 0 so step 0 needs no matmul.
    h = jnp.tanh(xs[0])
    hs = [h]
    for t in range(1, T):
        h = jnp.tanh(xs[t]
                     + jnp.dot(h, whh, preferred_element_type=jnp.float32))
        hs.append(h)

    # Single batched output projection over all timesteps (M = B*T),
    # assembled batch-major so the output needs no wrapper transpose.
    h_flat = jnp.stack(hs, axis=1).reshape(B * T, H)       # (B*T, H)
    logits = (jnp.dot(h_flat, wout_ref[...],
                      preferred_element_type=jnp.float32)
              + bout_ref[...])
    o_ref[...] = logits.astype(o_ref.dtype)


def prepare_params(params):
    """One-time parameter layout prep (runs eagerly, not per forward call)."""
    vocab = params["w_out"].shape[0]
    vpad = _round_up(vocab, 128)
    vrow = _round_up(vocab, 8)

    # Embedding -> Linear is affine, so precompose exactly.
    table = (params["embed"].astype(jnp.float32) @ params["w_ih"].T
             + params["b_ih"] + params["b_hh"])            # (V, 128)
    table = jnp.zeros((vrow, HIDDEN_DIM), jnp.float32).at[:vocab, :].set(table)

    whh_t = jnp.transpose(params["w_hh"]).astype(jnp.float32)
    wout_pad = jnp.zeros((HIDDEN_DIM, vpad), jnp.float32).at[:, :vocab].set(
        jnp.transpose(params["w_out"]))
    bout_pad = jnp.zeros((1, vpad), jnp.float32).at[:, :vocab].set(params["b_out"])

    return {
        "table": table,          # (Vrow, 128)
        "whh_t": whh_t,          # (128, 128)
        "wout_pad": wout_pad,    # (128, VPAD)
        "bout_pad": bout_pad,    # (1, VPAD)
    }, vocab


@partial(jax.jit, static_argnames=("vocab",))
def rnn_model_forward(tokens, table, whh_t, wout_pad, bout_pad, *, vocab):
    """tokens: [B, T] int32. Returns logits [B, T, vocab] float32."""
    B, T = tokens.shape
    vpad = wout_pad.shape[1]

    out_flat = pl.pallas_call(
        rnn_kernel,
        out_shape=jax.ShapeDtypeStruct((B * T, vpad), jnp.float32),
        in_specs=[
            pl.BlockSpec(memory_space=pltpu.MemorySpace.SMEM),   # tokens
            pl.BlockSpec(memory_space=pltpu.MemorySpace.VMEM),   # emb-proj table
            pl.BlockSpec(memory_space=pltpu.MemorySpace.VMEM),   # W_hh^T
            pl.BlockSpec(memory_space=pltpu.MemorySpace.VMEM),   # W_out^T (padded)
            pl.BlockSpec(memory_space=pltpu.MemorySpace.VMEM),   # b_out (padded)
        ],
        out_specs=pl.BlockSpec(memory_space=pltpu.MemorySpace.VMEM),
    )(tokens, table, whh_t, wout_pad, bout_pad)

    # Padded logit columns are exactly 0.0 — this slice is mandatory.
    return out_flat.reshape(B, T, vpad)[..., :vocab]


def rnn_model_reference(tokens, params):
    """Pure-JAX reference matching torch semantics."""
    embed = jnp.take(params["embed"], tokens, axis=0)       # [B, T, 32]
    B, T, _ = embed.shape

    def step(h, x_t):
        h_new = jnp.tanh(x_t @ params["w_ih"].T + params["b_ih"]
                         + h @ params["w_hh"].T + params["b_hh"])
        return h_new, h_new

    h0 = jnp.zeros((B, HIDDEN_DIM), jnp.float32)
    _, o = jax.lax.scan(step, h0, jnp.transpose(embed, (1, 0, 2)))
    o = jnp.transpose(o, (1, 0, 2))                          # [B, T, 128]
    return o @ params["w_out"].T + params["b_out"]


def init_params(key, vocab):
    """Deterministic init mimicking PyTorch default uniform(-1/sqrt(h), 1/sqrt(h))."""
    ks = jax.random.split(key, 7)
    s = 1.0 / jnp.sqrt(jnp.float32(HIDDEN_DIM))
    return {
        "embed": jax.random.normal(ks[0], (vocab, EMBED_DIM), jnp.float32),
        "w_ih": jax.random.uniform(ks[1], (HIDDEN_DIM, EMBED_DIM), jnp.float32, -s, s),
        "w_hh": jax.random.uniform(ks[2], (HIDDEN_DIM, HIDDEN_DIM), jnp.float32, -s, s),
        "b_ih": jax.random.uniform(ks[3], (HIDDEN_DIM,), jnp.float32, -s, s),
        "b_hh": jax.random.uniform(ks[4], (HIDDEN_DIM,), jnp.float32, -s, s),
        "w_out": jax.random.uniform(ks[5], (vocab, HIDDEN_DIM), jnp.float32, -s, s),
        "b_out": jax.random.uniform(ks[6], (vocab,), jnp.float32, -s, s),
    }


if __name__ == "__main__":
    key = jax.random.PRNGKey(0)
    k_param, k_tok = jax.random.split(key)

    num_letters, offset = 26, 4
    vocab = num_letters + offset          # len(letters_list) + offset
    B, T = 2, 8

    params = init_params(k_param, vocab)
    tokens = jax.random.randint(k_tok, (B, T), 0, vocab, dtype=jnp.int32)

    prep, V = prepare_params(params)      # one-time layout prep
    out = jax.block_until_ready(
        rnn_model_forward(tokens, prep["table"], prep["whh_t"],
                          prep["wout_pad"], prep["bout_pad"], vocab=V))
    ref = jax.block_until_ready(rnn_model_reference(tokens, params))

    assert out.shape == (B, T, vocab), out.shape
    assert jnp.allclose(out, ref, atol=1e-4, rtol=1e-4), float(jnp.max(jnp.abs(out - ref)))
    print("KERNEL_OK")
</pallas_src>

<mosaic_0001>
module attributes {stable_mosaic.version = 11 : i64} {
  func.func @rnn_kernel(%arg0: memref<2x8xi32, #tpu.memory_space<smem>>, %arg1: memref<32x128xf32, #tpu.memory_space<vmem>>, %arg2: memref<128x128xf32, #tpu.memory_space<vmem>>, %arg3: memref<128x128xf32, #tpu.memory_space<vmem>>, %arg4: memref<1x128xf32, #tpu.memory_space<vmem>>, %arg5: memref<16x128xf32, #tpu.memory_space<vmem>>) attributes {dimension_semantics = [], scalar_prefetch = 0 : i64, scratch_operands = 0 : i64, tpu.core_type = #tpu.core_type<tc>} {
    %c0 = arith.constant 0 : index
    %c0_0 = arith.constant 0 : index
    %0 = memref.load %arg0[%c0, %c0_0] : memref<2x8xi32, #tpu.memory_space<smem>>
    %1 = arith.index_cast %0 : i32 to index
    %c0_1 = arith.constant 0 : index
    %2 = vector.load %arg1[%1, %c0_1] : memref<32x128xf32, #tpu.memory_space<vmem>>, vector<1x128xf32>
    %c1 = arith.constant 1 : index
    %c0_2 = arith.constant 0 : index
    %3 = memref.load %arg0[%c1, %c0_2] : memref<2x8xi32, #tpu.memory_space<smem>>
    %4 = arith.index_cast %3 : i32 to index
    %c0_3 = arith.constant 0 : index
    %5 = vector.load %arg1[%4, %c0_3] : memref<32x128xf32, #tpu.memory_space<vmem>>, vector<1x128xf32>
    %6 = tpu.concatenate %2, %5 in 0 : vector<1x128xf32>, vector<1x128xf32> -> vector<2x128xf32>
    %c0_4 = arith.constant 0 : index
    %c1_5 = arith.constant 1 : index
    %7 = memref.load %arg0[%c0_4, %c1_5] : memref<2x8xi32, #tpu.memory_space<smem>>
    %8 = arith.index_cast %7 : i32 to index
    %c0_6 = arith.constant 0 : index
    %9 = vector.load %arg1[%8, %c0_6] : memref<32x128xf32, #tpu.memory_space<vmem>>, vector<1x128xf32>
    %c1_7 = arith.constant 1 : index
    %c1_8 = arith.constant 1 : index
    %10 = memref.load %arg0[%c1_7, %c1_8] : memref<2x8xi32, #tpu.memory_space<smem>>
    %11 = arith.index_cast %10 : i32 to index
    %c0_9 = arith.constant 0 : index
    %12 = vector.load %arg1[%11, %c0_9] : memref<32x128xf32, #tpu.memory_space<vmem>>, vector<1x128xf32>
    %13 = tpu.concatenate %9, %12 in 0 : vector<1x128xf32>, vector<1x128xf32> -> vector<2x128xf32>
    %c0_10 = arith.constant 0 : index
    %c2 = arith.constant 2 : index
    %14 = memref.load %arg0[%c0_10, %c2] : memref<2x8xi32, #tpu.memory_space<smem>>
    %15 = arith.index_cast %14 : i32 to index
    %c0_11 = arith.constant 0 : index
    %16 = vector.load %arg1[%15, %c0_11] : memref<32x128xf32, #tpu.memory_space<vmem>>, vector<1x128xf32>
    %c1_12 = arith.constant 1 : index
    %c2_13 = arith.constant 2 : index
    %17 = memref.load %arg0[%c1_12, %c2_13] : memref<2x8xi32, #tpu.memory_space<smem>>
    %18 = arith.index_cast %17 : i32 to index
    %c0_14 = arith.constant 0 : index
    %19 = vector.load %arg1[%18, %c0_14] : memref<32x128xf32, #tpu.memory_space<vmem>>, vector<1x128xf32>
    %20 = tpu.concatenate %16, %19 in 0 : vector<1x128xf32>, vector<1x128xf32> -> vector<2x128xf32>
    %c0_15 = arith.constant 0 : index
    %c3 = arith.constant 3 : index
    %21 = memref.load %arg0[%c0_15, %c3] : memref<2x8xi32, #tpu.memory_space<smem>>
    %22 = arith.index_cast %21 : i32 to index
    %c0_16 = arith.constant 0 : index
    %23 = vector.load %arg1[%22, %c0_16] : memref<32x128xf32, #tpu.memory_space<vmem>>, vector<1x128xf32>
    %c1_17 = arith.constant 1 : index
    %c3_18 = arith.constant 3 : index
    %24 = memref.load %arg0[%c1_17, %c3_18] : memref<2x8xi32, #tpu.memory_space<smem>>
    %25 = arith.index_cast %24 : i32 to index
    %c0_19 = arith.constant 0 : index
    %26 = vector.load %arg1[%25, %c0_19] : memref<32x128xf32, #tpu.memory_space<vmem>>, vector<1x128xf32>
    %27 = tpu.concatenate %23, %26 in 0 : vector<1x128xf32>, vector<1x128xf32> -> vector<2x128xf32>
    %c0_20 = arith.constant 0 : index
    %c4 = arith.constant 4 : index
    %28 = memref.load %arg0[%c0_20, %c4] : memref<2x8xi32, #tpu.memory_space<smem>>
    %29 = arith.index_cast %28 : i32 to index
    %c0_21 = arith.constant 0 : index
    %30 = vector.load %arg1[%29, %c0_21] : memref<32x128xf32, #tpu.memory_space<vmem>>, vector<1x128xf32>
    %c1_22 = arith.constant 1 : index
    %c4_23 = arith.constant 4 : index
    %31 = memref.load %arg0[%c1_22, %c4_23] : memref<2x8xi32, #tpu.memory_space<smem>>
    %32 = arith.index_cast %31 : i32 to index
    %c0_24 = arith.constant 0 : index
    %33 = vector.load %arg1[%32, %c0_24] : memref<32x128xf32, #tpu.memory_space<vmem>>, vector<1x128xf32>
    %34 = tpu.concatenate %30, %33 in 0 : vector<1x128xf32>, vector<1x128xf32> -> vector<2x128xf32>
    %c0_25 = arith.constant 0 : index
    %c5 = arith.constant 5 : index
    %35 = memref.load %arg0[%c0_25, %c5] : memref<2x8xi32, #tpu.memory_space<smem>>
    %36 = arith.index_cast %35 : i32 to index
    %c0_26 = arith.constant 0 : index
    %37 = vector.load %arg1[%36, %c0_26] : memref<32x128xf32, #tpu.memory_space<vmem>>, vector<1x128xf32>
    %c1_27 = arith.constant 1 : index
    %c5_28 = arith.constant 5 : index
    %38 = memref.load %arg0[%c1_27, %c5_28] : memref<2x8xi32, #tpu.memory_space<smem>>
    %39 = arith.index_cast %38 : i32 to index
    %c0_29 = arith.constant 0 : index
    %40 = vector.load %arg1[%39, %c0_29] : memref<32x128xf32, #tpu.memory_space<vmem>>, vector<1x128xf32>
    %41 = tpu.concatenate %37, %40 in 0 : vector<1x128xf32>, vector<1x128xf32> -> vector<2x128xf32>
    %c0_30 = arith.constant 0 : index
    %c6 = arith.constant 6 : index
    %42 = memref.load %arg0[%c0_30, %c6] : memref<2x8xi32, #tpu.memory_space<smem>>
    %43 = arith.index_cast %42 : i32 to index
    %c0_31 = arith.constant 0 : index
    %44 = vector.load %arg1[%43, %c0_31] : memref<32x128xf32, #tpu.memory_space<vmem>>, vector<1x128xf32>
    %c1_32 = arith.constant 1 : index
    %c6_33 = arith.constant 6 : index
    %45 = memref.load %arg0[%c1_32, %c6_33] : memref<2x8xi32, #tpu.memory_space<smem>>
    %46 = arith.index_cast %45 : i32 to index
    %c0_34 = arith.constant 0 : index
    %47 = vector.load %arg1[%46, %c0_34] : memref<32x128xf32, #tpu.memory_space<vmem>>, vector<1x128xf32>
    %48 = tpu.concatenate %44, %47 in 0 : vector<1x128xf32>, vector<1x128xf32> -> vector<2x128xf32>
    %c0_35 = arith.constant 0 : index
    %c7 = arith.constant 7 : index
    %49 = memref.load %arg0[%c0_35, %c7] : memref<2x8xi32, #tpu.memory_space<smem>>
    %50 = arith.index_cast %49 : i32 to index
    %c0_36 = arith.constant 0 : index
    %51 = vector.load %arg1[%50, %c0_36] : memref<32x128xf32, #tpu.memory_space<vmem>>, vector<1x128xf32>
    %c1_37 = arith.constant 1 : index
    %c7_38 = arith.constant 7 : index
    %52 = memref.load %arg0[%c1_37, %c7_38] : memref<2x8xi32, #tpu.memory_space<smem>>
    %53 = arith.index_cast %52 : i32 to index
    %c0_39 = arith.constant 0 : index
    %54 = vector.load %arg1[%53, %c0_39] : memref<32x128xf32, #tpu.memory_space<vmem>>, vector<1x128xf32>
    %55 = tpu.concatenate %51, %54 in 0 : vector<1x128xf32>, vector<1x128xf32> -> vector<2x128xf32>
    %c0_40 = arith.constant 0 : index
    %c0_41 = arith.constant 0 : index
    %56 = vector.load %arg2[%c0_40, %c0_41] : memref<128x128xf32, #tpu.memory_space<vmem>>, vector<128x128xf32>
    %57 = math.tanh %6 : vector<2x128xf32>
    %cst = arith.constant dense<0.000000e+00> : vector<2x128xf32>
    %58 = tpu.matmul %57, %56, %cst {dimension_numbers = #tpu.dot_dimension_numbers<[1], [0], [0], [1], [0, 0, 1, 1], [], []>} : vector<2x128xf32>, vector<128x128xf32>, vector<2x128xf32> -> vector<2x128xf32>
    %59 = arith.addf %13, %58 : vector<2x128xf32>
    %60 = math.tanh %59 : vector<2x128xf32>
    %cst_42 = arith.constant dense<0.000000e+00> : vector<2x128xf32>
    %61 = tpu.matmul %60, %56, %cst_42 {dimension_numbers = #tpu.dot_dimension_numbers<[1], [0], [0], [1], [0, 0, 1, 1], [], []>} : vector<2x128xf32>, vector<128x128xf32>, vector<2x128xf32> -> vector<2x128xf32>
    %62 = arith.addf %20, %61 : vector<2x128xf32>
    %63 = math.tanh %62 : vector<2x128xf32>
    %cst_43 = arith.constant dense<0.000000e+00> : vector<2x128xf32>
    %64 = tpu.matmul %63, %56, %cst_43 {dimension_numbers = #tpu.dot_dimension_numbers<[1], [0], [0], [1], [0, 0, 1, 1], [], []>} : vector<2x128xf32>, vector<128x128xf32>, vector<2x128xf32> -> vector<2x128xf32>
    %65 = arith.addf %27, %64 : vector<2x128xf32>
    %66 = math.tanh %65 : vector<2x128xf32>
    %cst_44 = arith.constant dense<0.000000e+00> : vector<2x128xf32>
    %67 = tpu.matmul %66, %56, %cst_44 {dimension_numbers = #tpu.dot_dimension_numbers<[1], [0], [0], [1], [0, 0, 1, 1], [], []>} : vector<2x128xf32>, vector<128x128xf32>, vector<2x128xf32> -> vector<2x128xf32>
    %68 = arith.addf %34, %67 : vector<2x128xf32>
    %69 = math.tanh %68 : vector<2x128xf32>
    %cst_45 = arith.constant dense<0.000000e+00> : vector<2x128xf32>
    %70 = tpu.matmul %69, %56, %cst_45 {dimension_numbers = #tpu.dot_dimension_numbers<[1], [0], [0], [1], [0, 0, 1, 1], [], []>} : vector<2x128xf32>, vector<128x128xf32>, vector<2x128xf32> -> vector<2x128xf32>
    %71 = arith.addf %41, %70 : vector<2x128xf32>
    %72 = math.tanh %71 : vector<2x128xf32>
    %cst_46 = arith.constant dense<0.000000e+00> : vector<2x128xf32>
    %73 = tpu.matmul %72, %56, %cst_46 {dimension_numbers = #tpu.dot_dimension_numbers<[1], [0], [0], [1], [0, 0, 1, 1], [], []>} : vector<2x128xf32>, vector<128x128xf32>, vector<2x128xf32> -> vector<2x128xf32>
    %74 = arith.addf %48, %73 : vector<2x128xf32>
    %75 = math.tanh %74 : vector<2x128xf32>
    %cst_47 = arith.constant dense<0.000000e+00> : vector<2x128xf32>
    %76 = tpu.matmul %75, %56, %cst_47 {dimension_numbers = #tpu.dot_dimension_numbers<[1], [0], [0], [1], [0, 0, 1, 1], [], []>} : vector<2x128xf32>, vector<128x128xf32>, vector<2x128xf32> -> vector<2x128xf32>
    %77 = arith.addf %55, %76 : vector<2x128xf32>
    %78 = math.tanh %77 : vector<2x128xf32>
    %79 = vector.shape_cast %57 : vector<2x128xf32> to vector<2x1x128xf32>
    %80 = vector.shape_cast %60 : vector<2x128xf32> to vector<2x1x128xf32>
    %81 = vector.shape_cast %63 : vector<2x128xf32> to vector<2x1x128xf32>
    %82 = vector.shape_cast %66 : vector<2x128xf32> to vector<2x1x128xf32>
    %83 = vector.shape_cast %69 : vector<2x128xf32> to vector<2x1x128xf32>
    %84 = vector.shape_cast %72 : vector<2x128xf32> to vector<2x1x128xf32>
    %85 = vector.shape_cast %75 : vector<2x128xf32> to vector<2x1x128xf32>
    %86 = vector.shape_cast %78 : vector<2x128xf32> to vector<2x1x128xf32>
    %87 = tpu.concatenate %79, %80, %81, %82, %83, %84, %85, %86 in 1 : vector<2x1x128xf32>, vector<2x1x128xf32>, vector<2x1x128xf32>, vector<2x1x128xf32>, vector<2x1x128xf32>, vector<2x1x128xf32>, vector<2x1x128xf32>, vector<2x1x128xf32> -> vector<2x8x128xf32>
    %88 = vector.shape_cast %87 : vector<2x8x128xf32> to vector<16x128xf32>
    %c0_48 = arith.constant 0 : index
    %c0_49 = arith.constant 0 : index
    %89 = vector.load %arg3[%c0_48, %c0_49] : memref<128x128xf32, #tpu.memory_space<vmem>>, vector<128x128xf32>
    %cst_50 = arith.constant dense<0.000000e+00> : vector<16x128xf32>
    %90 = tpu.matmul %88, %89, %cst_50 {dimension_numbers = #tpu.dot_dimension_numbers<[1], [0], [0], [1], [0, 0, 1, 1], [], []>} : vector<16x128xf32>, vector<128x128xf32>, vector<16x128xf32> -> vector<16x128xf32>
    %c0_51 = arith.constant 0 : index
    %c0_52 = arith.constant 0 : index
    %91 = vector.load %arg4[%c0_51, %c0_52] : memref<1x128xf32, #tpu.memory_space<vmem>>, vector<1x128xf32>
    %92 = vector.broadcast %91 : vector<1x128xf32> to vector<16x128xf32>
    %93 = arith.addf %90, %92 : vector<16x128xf32>
    %c0_53 = arith.constant 0 : index
    %c0_54 = arith.constant 0 : index
    %94 = vector.load %arg5[%c0_53, %c0_54] : memref<16x128xf32, #tpu.memory_space<vmem>>, vector<16x128xf32>
    tpu.vector_store %arg5[%c0_53, %c0_54], %93 {strides = array<i32>} : memref<16x128xf32, #tpu.memory_space<vmem>>, vector<16x128xf32>,
    return
  }
}

</mosaic_0001>

<llo_original>
// kernel: rnn_model_forward.1
$region0: #{rnn_model_forward.1}
  #allocation0 [shape = 'u32[]', space=smem, size = 0x4, offset = 0x4, fixed_abs, tag = 'smem constant byte address 0x4 - core index']
  #allocation1 [shape = 'u32[144,128]{1,0:T(1,128)}', space=vmem, size = 0x12000, scoped, tag = 'internal scratch']
  %s0 = inlined_call_operand.hbm [shape: s32[2,8], index: 0, kind: input, shape index: {}]
  %s1 = inlined_call_operand.hbm [shape: f32[32,128], index: 1, kind: input, shape index: {}]
  %s2 = inlined_call_operand.hbm [shape: f32[128,128], index: 2, kind: input, shape index: {}]
  %s3 = inlined_call_operand.hbm [shape: f32[128,128], index: 3, kind: input, shape index: {}]
  %s4 = inlined_call_operand.vmem [shape: f32[1,128], index: 4, kind: input, shape index: {}]
  %s5 = inlined_call_operand.hbm [shape: f32[16,128], index: 5, kind: output, shape index: {}]
  %s6 = sld [smem:[#allocation0]]
  $region46: #{rnn_model_forward.1} parent=0
    _
  %s8 = ssub.s32 1, %s6
  %s9 = scalar_select 0, %s8, %s6
  $region1: #{rnn_model_forward.1} parent=0
    #allocation2 [shape = 'u8[1024]{0}', space=smem, size = 0x400, scoped, tag = 'input window, operand 0, single buffered']
    #allocation3 [shape = 's32[1]{0}', space=sflag, size = 0x4, scoped, tag = 'scoped memory for rnn_model_forward.1']
    #allocation4 [shape = 's32[1]{0}', space=sflag, size = 0x4, scoped, tag = 'scoped memory for rnn_model_forward.1']
    #allocation5 [shape = 's32[1]{0}', space=sflag, size = 0x4, scoped, tag = 'scoped memory for rnn_model_forward.1']
    #allocation6 [shape = 'u8[16384]{0}', space=vmem, size = 0x4000, scoped, tag = 'input window, operand 1, single buffered']
    #allocation7 [shape = 'u8[65536]{0}', space=vmem, size = 0x10000, scoped, tag = 'input window, operand 2, single buffered']
    #allocation8 [shape = 's32[1]{0}', space=sflag, size = 0x4, scoped, tag = 'scoped memory for rnn_model_forward.1']
    #allocation9 [shape = 'u8[65536]{0}', space=vmem, size = 0x10000, scoped, tag = 'input window, operand 3, single buffered']
    #allocation10 [shape = 'u8[8192]{0}', space=vmem, size = 0x2000, scoped, tag = 'output window, operand 0, single buffered']
    %10 = vsyncpa [#allocation5], 0
    %11 = vsyncpa [#allocation3], 0
    %12 = vsyncpa [#allocation8], 0
    %13 = vsyncpa [#allocation4], 0
    // Predicated region
    $region2: #{rnn_model_forward.1} parent=1 // pred_check
      _
    $region3: #{rnn_model_forward.1} parent=1 // pred_check_branch
      %15 = sbr.rel (0) target = $region5
    $region4: #{rnn_model_forward.1} parent=1 // pred_region
      %s17 = ssub.s32 32, 32
      %18 = vsyncadd [#allocation5], %s17
      %21 = dma.hbm_to_smem %s0, 32, [#allocation2], [#allocation5]
    $region5: #{rnn_model_forward.1} parent=1 // pred_fallthru
      _
    // Predicated region
    $region6: #{rnn_model_forward.1} parent=1 // pred_check
      _
    $region7: #{rnn_model_forward.1} parent=1 // pred_check_branch
      %23 = sbr.rel (0) target = $region9
    $region8: #{rnn_model_forward.1} parent=1 // pred_region
      %s25 = ssub.s32 512, 512
      %26 = vsyncadd [#allocation3], %s25
      %s27 = sshll.u32 [#allocation6], 4
      %s28 = int_to_ptr.vmem [resolvable:$true] %s27
      %33 = dma.hbm_to_vmem [thread:$0]  %s1, 512, %s28, [#allocation3], 128, 128, 8
    $region9: #{rnn_model_forward.1} parent=1 // pred_fallthru
      _
    // Predicated region
    $region10: #{rnn_model_forward.1} parent=1 // pred_check
      _
    $region11: #{rnn_model_forward.1} parent=1 // pred_check_branch
      %35 = sbr.rel (0) target = $region13
    $region12: #{rnn_model_forward.1} parent=1 // pred_region
      %s37 = ssub.s32 2048, 2048
      %38 = vsyncadd [#allocation8], %s37
      %s39 = sshll.u32 [#allocation7], 4
      %s40 = int_to_ptr.vmem [resolvable:$true] %s39
      %45 = dma.hbm_to_vmem [thread:$0]  %s2, 2048, %s40, [#allocation8], 128, 128, 8
    $region13: #{rnn_model_forward.1} parent=1 // pred_fallthru
      _
    // Predicated region
    $region14: #{rnn_model_forward.1} parent=1 // pred_check
      _
    $region15: #{rnn_model_forward.1} parent=1 // pred_check_branch
      %47 = sbr.rel (0) target = $region17
    $region16: #{rnn_model_forward.1} parent=1 // pred_region
      %s49 = ssub.s32 2048, 2048
      %50 = vsyncadd [#allocation8], %s49
      %s51 = sshll.u32 [#allocation9], 4
      %s52 = int_to_ptr.vmem [resolvable:$true] %s51
      %57 = dma.hbm_to_vmem [thread:$0]  %s3, 2048, %s52, [#allocation8], 128, 128, 8
    $region17: #{rnn_model_forward.1} parent=1 // pred_fallthru
      _
    // Predicated region
    $region18: #{rnn_model_forward.1} parent=1 // pred_check
      _
    $region19: #{rnn_model_forward.1} parent=1 // pred_check_branch
      %59 = sbr.rel (0) target = $region21
    $region20: #{rnn_model_forward.1} parent=1 // pred_region
      _
    $region21: #{rnn_model_forward.1} parent=1 // pred_fallthru
      _
    // Predicated region
    $region22: #{rnn_model_forward.1} parent=1 // pred_check
      _
    $region23: #{rnn_model_forward.1} parent=1 // pred_check_branch
      %61 = sbr.rel (0) target = $region25
    $region24: #{rnn_model_forward.1} parent=1 // pred_region
      %62 = dma.done [#allocation5], 32
    $region25: #{rnn_model_forward.1} parent=1 // pred_fallthru
      _
    // Predicated region
    $region26: #{rnn_model_forward.1} parent=1 // pred_check
      _
    $region27: #{rnn_model_forward.1} parent=1 // pred_check_branch
      %64 = sbr.rel (0) target = $region29
    $region28: #{rnn_model_forward.1} parent=1 // pred_region
      %65 = dma.done [#allocation3], 512
    $region29: #{rnn_model_forward.1} parent=1 // pred_fallthru
      _
    // Predicated region
    $region30: #{rnn_model_forward.1} parent=1 // pred_check
      _
    $region31: #{rnn_model_forward.1} parent=1 // pred_check_branch
      %67 = sbr.rel (0) target = $region33
    $region32: #{rnn_model_forward.1} parent=1 // pred_region
      %68 = dma.done [#allocation8], 2048
    $region33: #{rnn_model_forward.1} parent=1 // pred_fallthru
      _
    // Predicated region
    $region34: #{rnn_model_forward.1} parent=1 // pred_check
      _
    $region35: #{rnn_model_forward.1} parent=1 // pred_check_branch
      %70 = sbr.rel (0) target = $region37
    $region36: #{rnn_model_forward.1} parent=1 // pred_region
      %71 = dma.done [#allocation8], 2048
    $region37: #{rnn_model_forward.1} parent=1 // pred_fallthru
      _
    %72 = sfence
    %s73 = sld [smem:[#allocation2]]
    %s74 = scalar_lea.vmem [#allocation6], %s73
    %v75 = vld [vmem:[%s74] sm:$0x1]
    %s76 = sld [smem:[#allocation2 + $0x80]]
    %s77 = scalar_lea.vmem [#allocation6], %s76
    %v78 = vld [vmem:[%s77] sm:$0x1]
    %v80 = vrot.slane %v78, 7
    %vm82 = vcmask 1040384
    %v83 = vsel %vm82, %v75, %v80
    %s84 = sld [smem:[#allocation2 + $0x1]]
    %s85 = scalar_lea.vmem [#allocation6], %s84
    %v86 = vld [vmem:[%s85] sm:$0x1]
    %s87 = sld [smem:[#allocation2 + $0x81]]
    %s88 = scalar_lea.vmem [#allocation6], %s87
    %v89 = vld [vmem:[%s88] sm:$0x1]
    %v91 = vrot.slane %v89, 7
    %v93 = vsel %vm82, %v86, %v91
    %s94 = sld [smem:[#allocation2 + $0x2]]
    %s95 = scalar_lea.vmem [#allocation6], %s94
    %v96 = vld [vmem:[%s95] sm:$0x1]
    %s97 = sld [smem:[#allocation2 + $0x82]]
    %s98 = scalar_lea.vmem [#allocation6], %s97
    %v99 = vld [vmem:[%s98] sm:$0x1]
    %v101 = vrot.slane %v99, 7
    %v103 = vsel %vm82, %v96, %v101
    %s104 = sld [smem:[#allocation2 + $0x3]]
    %s105 = scalar_lea.vmem [#allocation6], %s104
    %v106 = vld [vmem:[%s105] sm:$0x1]
    %s107 = sld [smem:[#allocation2 + $0x83]]
    %s108 = scalar_lea.vmem [#allocation6], %s107
    %v109 = vld [vmem:[%s108] sm:$0x1]
    %v111 = vrot.slane %v109, 7
    %v113 = vsel %vm82, %v106, %v111
    %s114 = sld [smem:[#allocation2 + $0x4]]
    %s115 = scalar_lea.vmem [#allocation6], %s114
    %v116 = vld [vmem:[%s115] sm:$0x1]
    %s117 = sld [smem:[#allocation2 + $0x84]]
    %s118 = scalar_lea.vmem [#allocation6], %s117
    %v119 = vld [vmem:[%s118] sm:$0x1]
    %v121 = vrot.slane %v119, 7
    %v123 = vsel %vm82, %v116, %v121
    %s124 = sld [smem:[#allocation2 + $0x5]]
    %s125 = scalar_lea.vmem [#allocation6], %s124
    %v126 = vld [vmem:[%s125] sm:$0x1]
    %s127 = sld [smem:[#allocation2 + $0x85]]
    %s128 = scalar_lea.vmem [#allocation6], %s127
    %v129 = vld [vmem:[%s128] sm:$0x1]
    %v131 = vrot.slane %v129, 7
    %v133 = vsel %vm82, %v126, %v131
    %s134 = sld [smem:[#allocation2 + $0x6]]
    %s135 = scalar_lea.vmem [#allocation6], %s134
    %v136 = vld [vmem:[%s135] sm:$0x1]
    %s137 = sld [smem:[#allocation2 + $0x86]]
    %s138 = scalar_lea.vmem [#allocation6], %s137
    %v139 = vld [vmem:[%s138] sm:$0x1]
    %v141 = vrot.slane %v139, 7
    %v143 = vsel %vm82, %v136, %v141
    %s144 = sld [smem:[#allocation2 + $0x7]]
    %s145 = scalar_lea.vmem [#allocation6], %s144
    %v146 = vld [vmem:[%s145] sm:$0x1]
    %s147 = sld [smem:[#allocation2 + $0x87]]
    %s148 = scalar_lea.vmem [#allocation6], %s147
    %v149 = vld [vmem:[%s148] sm:$0x1]
    %v151 = vrot.slane %v149, 7
    %v153 = vsel %vm82, %v146, %v151
    %v154 = vld [vmem:[#allocation7] sm:$0xff]
    %v155 = vld [vmem:[#allocation7 + $0x8] sm:$0xff]
    %v156 = vld [vmem:[#allocation7 + $0x10] sm:$0xff]
    %v157 = vld [vmem:[#allocation7 + $0x18] sm:$0xff]
    %v158 = vld [vmem:[#allocation7 + $0x20] sm:$0xff]
    %v159 = vld [vmem:[#allocation7 + $0x28] sm:$0xff]
    %v160 = vld [vmem:[#allocation7 + $0x30] sm:$0xff]
    %v161 = vld [vmem:[#allocation7 + $0x38] sm:$0xff]
    %v162 = vld [vmem:[#allocation7 + $0x40] sm:$0xff]
    %v163 = vld [vmem:[#allocation7 + $0x48] sm:$0xff]
    %v164 = vld [vmem:[#allocation7 + $0x50] sm:$0xff]
    %v165 = vld [vmem:[#allocation7 + $0x58] sm:$0xff]
    %v166 = vld [vmem:[#allocation7 + $0x60] sm:$0xff]
    %v167 = vld [vmem:[#allocation7 + $0x68] sm:$0xff]
    %v168 = vld [vmem:[#allocation7 + $0x70] sm:$0xff]
    %v169 = vld [vmem:[#allocation7 + $0x78] sm:$0xff]
    %v170 = vtanh.pop %v83
    %171 = vmatprep.subr.mxu0 0.0
    %172 = vmatpush1.msra.mxu0 %v169
    %173 = vmatprep.subr.mxu0 0.0
    %174 = vmatpush1.msra.mxu0 %v168
    %175 = vmatprep.subr.mxu0 0.0
    %176 = vmatpush1.msra.mxu0 %v167
    %177 = vmatprep.subr.mxu0 0.0
    %178 = vmatpush1.msra.mxu0 %v166
    %179 = vmatprep.subr.mxu0 0.0
    %180 = vmatpush1.msra.mxu0 %v165
    %181 = vmatprep.subr.mxu0 0.0
    %182 = vmatpush1.msra.mxu0 %v164
    %183 = vmatprep.subr.mxu0 0.0
    %184 = vmatpush1.msra.mxu0 %v163
    %185 = vmatprep.subr.mxu0 0.0
    %186 = vmatpush1.msra.mxu0 %v162
    %187 = vmatprep.subr.mxu0 0.0
    %188 = vmatpush1.msra.mxu0 %v161
    %189 = vmatprep.subr.mxu0 0.0
    %190 = vmatpush1.msra.mxu0 %v160
    %191 = vmatprep.subr.mxu0 0.0
    %192 = vmatpush1.msra.mxu0 %v159
    %193 = vmatprep.subr.mxu0 0.0
    %194 = vmatpush1.msra.mxu0 %v158
    %195 = vmatprep.subr.mxu0 0.0
    %196 = vmatpush1.msra.mxu0 %v157
    %197 = vmatprep.subr.mxu0 0.0
    %198 = vmatpush1.msra.mxu0 %v156
    %199 = vmatprep.subr.mxu0 0.0
    %200 = vmatpush1.msra.mxu0 %v155
    %201 = vmatprep.subr.mxu0 0.0
    %202 = vmatpush1.msra.mxu0 %v154
    %203 = vmatprep.subr.mxu0 0.0
    %204 = vmatpush2.msra.mxu0 0.0
    %205 = vmatprep.subr.mxu0 0.0
    %206 = vmatpush2.msra.mxu0 0.0
    %207 = vmatprep.subr.mxu0 0.0
    %208 = vmatpush2.msra.mxu0 0.0
    %209 = vmatprep.subr.mxu0 0.0
    %210 = vmatpush2.msra.mxu0 0.0
    %211 = vmatprep.subr.mxu0 0.0
    %212 = vmatpush2.msra.mxu0 0.0
    %213 = vmatprep.subr.mxu0 0.0
    %214 = vmatpush2.msra.mxu0 0.0
    %215 = vmatprep.subr.mxu0 0.0
    %216 = vmatpush2.msra.mxu0 0.0
    %217 = vmatprep.subr.mxu0 0.0
    %218 = vmatpush2.msra.mxu0 0.0
    %219 = vmatprep.subr.mxu0 0.0
    %220 = vmatpush2.msra.mxu0 0.0
    %221 = vmatprep.subr.mxu0 0.0
    %222 = vmatpush2.msra.mxu0 0.0
    %223 = vmatprep.subr.mxu0 0.0
    %224 = vmatpush2.msra.mxu0 0.0
    %225 = vmatprep.subr.mxu0 0.0
    %226 = vmatpush2.msra.mxu0 0.0
    %227 = vmatprep.subr.mxu0 0.0
    %228 = vmatpush2.msra.mxu0 0.0
    %229 = vmatprep.subr.mxu0 0.0
    %230 = vmatpush2.msra.mxu0 0.0
    %231 = vmatprep.subr.mxu0 0.0
    %232 = vmatpush2.msra.mxu0 0.0
    %233 = vmatprep.subr.mxu0 0.0
    %234 = vmatpush2.msra.mxu0 0.0
    %235 = vmatprep.mubr.f32.mxu0 0.0
    %236 = vmatmul.mubr.f32.gmra.mxu0 %v170
    %v237 = vpop.f32.mrf.mxu0
    %v238 = vadd.f32 0.0, %v237
    %v239 = vpop.f32.mrf.mxu0
    %240 = vdwg.mxu0
    %v241 = vadd.f32 %v93, %v238
    %v242 = vtanh.pop %v241
    %243 = vmatprep.subr.mxu0 0.0
    %244 = vmatpush1.msra.mxu0 %v169
    %245 = vmatprep.subr.mxu0 0.0
    %246 = vmatpush1.msra.mxu0 %v168
    %247 = vmatprep.subr.mxu0 0.0
    %248 = vmatpush1.msra.mxu0 %v167
    %249 = vmatprep.subr.mxu0 0.0
    %250 = vmatpush1.msra.mxu0 %v166
    %251 = vmatprep.subr.mxu0 0.0
    %252 = vmatpush1.msra.mxu0 %v165
    %253 = vmatprep.subr.mxu0 0.0
    %254 = vmatpush1.msra.mxu0 %v164
    %255 = vmatprep.subr.mxu0 0.0
    %256 = vmatpush1.msra.mxu0 %v163
    %257 = vmatprep.subr.mxu0 0.0
    %258 = vmatpush1.msra.mxu0 %v162
    %259 = vmatprep.subr.mxu0 0.0
    %260 = vmatpush1.msra.mxu0 %v161
    %261 = vmatprep.subr.mxu0 0.0
    %262 = vmatpush1.msra.mxu0 %v160
    %263 = vmatprep.subr.mxu0 0.0
    %264 = vmatpush1.msra.mxu0 %v159
    %265 = vmatprep.subr.mxu0 0.0
    %266 = vmatpush1.msra.mxu0 %v158
    %267 = vmatprep.subr.mxu0 0.0
    %268 = vmatpush1.msra.mxu0 %v157
    %269 = vmatprep.subr.mxu0 0.0
    %270 = vmatpush1.msra.mxu0 %v156
    %271 = vmatprep.subr.mxu0 0.0
    %272 = vmatpush1.msra.mxu0 %v155
    %273 = vmatprep.subr.mxu0 0.0
    %274 = vmatpush1.msra.mxu0 %v154
    %275 = vmatprep.subr.mxu0 0.0
    %276 = vmatpush2.msra.mxu0 0.0
    %277 = vmatprep.subr.mxu0 0.0
    %278 = vmatpush2.msra.mxu0 0.0
    %279 = vmatprep.subr.mxu0 0.0
    %280 = vmatpush2.msra.mxu0 0.0
    %281 = vmatprep.subr.mxu0 0.0
    %282 = vmatpush2.msra.mxu0 0.0
    %283 = vmatprep.subr.mxu0 0.0
    %284 = vmatpush2.msra.mxu0 0.0
    %285 = vmatprep.subr.mxu0 0.0
    %286 = vmatpush2.msra.mxu0 0.0
    %287 = vmatprep.subr.mxu0 0.0
    %288 = vmatpush2.msra.mxu0 0.0
    %289 = vmatprep.subr.mxu0 0.0
    %290 = vmatpush2.msra.mxu0 0.0
    %291 = vmatprep.subr.mxu0 0.0
    %292 = vmatpush2.msra.mxu0 0.0
    %293 = vmatprep.subr.mxu0 0.0
    %294 = vmatpush2.msra.mxu0 0.0
    %295 = vmatprep.subr.mxu0 0.0
    %296 = vmatpush2.msra.mxu0 0.0
    %297 = vmatprep.subr.mxu0 0.0
    %298 = vmatpush2.msra.mxu0 0.0
    %299 = vmatprep.subr.mxu0 0.0
    %300 = vmatpush2.msra.mxu0 0.0
    %301 = vmatprep.subr.mxu0 0.0
    %302 = vmatpush2.msra.mxu0 0.0
    %303 = vmatprep.subr.mxu0 0.0
    %304 = vmatpush2.msra.mxu0 0.0
    %305 = vmatprep.subr.mxu0 0.0
    %306 = vmatpush2.msra.mxu0 0.0
    %307 = vmatprep.mubr.f32.mxu0 0.0
    %308 = vmatmul.mubr.f32.gmra.mxu0 %v242
    %v309 = vpop.f32.mrf.mxu0
    %v310 = vadd.f32 0.0, %v309
    %v311 = vpop.f32.mrf.mxu0
    %312 = vdwg.mxu0
    %v313 = vadd.f32 %v103, %v310
    %v314 = vtanh.pop %v313
    %315 = vmatprep.subr.mxu0 0.0
    %316 = vmatpush1.msra.mxu0 %v169
    %317 = vmatprep.subr.mxu0 0.0
    %318 = vmatpush1.msra.mxu0 %v168
    %319 = vmatprep.subr.mxu0 0.0
    %320 = vmatpush1.msra.mxu0 %v167
    %321 = vmatprep.subr.mxu0 0.0
    %322 = vmatpush1.msra.mxu0 %v166
    %323 = vmatprep.subr.mxu0 0.0
    %324 = vmatpush1.msra.mxu0 %v165
    %325 = vmatprep.subr.mxu0 0.0
    %326 = vmatpush1.msra.mxu0 %v164
    %327 = vmatprep.subr.mxu0 0.0
    %328 = vmatpush1.msra.mxu0 %v163
    %329 = vmatprep.subr.mxu0 0.0
    %330 = vmatpush1.msra.mxu0 %v162
    %331 = vmatprep.subr.mxu0 0.0
    %332 = vmatpush1.msra.mxu0 %v161
    %333 = vmatprep.subr.mxu0 0.0
    %334 = vmatpush1.msra.mxu0 %v160
    %335 = vmatprep.subr.mxu0 0.0
    %336 = vmatpush1.msra.mxu0 %v159
    %337 = vmatprep.subr.mxu0 0.0
    %338 = vmatpush1.msra.mxu0 %v158
    %339 = vmatprep.subr.mxu0 0.0
    %340 = vmatpush1.msra.mxu0 %v157
    %341 = vmatprep.subr.mxu0 0.0
    %342 = vmatpush1.msra.mxu0 %v156
    %343 = vmatprep.subr.mxu0 0.0
    %344 = vmatpush1.msra.mxu0 %v155
    %345 = vmatprep.subr.mxu0 0.0
    %346 = vmatpush1.msra.mxu0 %v154
    %347 = vmatprep.subr.mxu0 0.0
    %348 = vmatpush2.msra.mxu0 0.0
    %349 = vmatprep.subr.mxu0 0.0
    %350 = vmatpush2.msra.mxu0 0.0
    %351 = vmatprep.subr.mxu0 0.0
    %352 = vmatpush2.msra.mxu0 0.0
    %353 = vmatprep.subr.mxu0 0.0
    %354 = vmatpush2.msra.mxu0 0.0
    %355 = vmatprep.subr.mxu0 0.0
    %356 = vmatpush2.msra.mxu0 0.0
    %357 = vmatprep.subr.mxu0 0.0
    %358 = vmatpush2.msra.mxu0 0.0
    %359 = vmatprep.subr.mxu0 0.0
    %360 = vmatpush2.msra.mxu0 0.0
    %361 = vmatprep.subr.mxu0 0.0
    %362 = vmatpush2.msra.mxu0 0.0
    %363 = vmatprep.subr.mxu0 0.0
    %364 = vmatpush2.msra.mxu0 0.0
    %365 = vmatprep.subr.mxu0 0.0
    %366 = vmatpush2.msra.mxu0 0.0
    %367 = vmatprep.subr.mxu0 0.0
    %368 = vmatpush2.msra.mxu0 0.0
    %369 = vmatprep.subr.mxu0 0.0
    %370 = vmatpush2.msra.mxu0 0.0
    %371 = vmatprep.subr.mxu0 0.0
    %372 = vmatpush2.msra.mxu0 0.0
    %373 = vmatprep.subr.mxu0 0.0
    %374 = vmatpush2.msra.mxu0 0.0
    %375 = vmatprep.subr.mxu0 0.0
    %376 = vmatpush2.msra.mxu0 0.0
    %377 = vmatprep.subr.mxu0 0.0
    %378 = vmatpush2.msra.mxu0 0.0
    %379 = vmatprep.mubr.f32.mxu0 0.0
    %380 = vmatmul.mubr.f32.gmra.mxu0 %v314
    %v381 = vpop.f32.mrf.mxu0
    %v382 = vadd.f32 0.0, %v381
    %v383 = vpop.f32.mrf.mxu0
    %384 = vdwg.mxu0
    %v385 = vadd.f32 %v113, %v382
    %v386 = vtanh.pop %v385
    %387 = vmatprep.subr.mxu0 0.0
    %388 = vmatpush1.msra.mxu0 %v169
    %389 = vmatprep.subr.mxu0 0.0
    %390 = vmatpush1.msra.mxu0 %v168
    %391 = vmatprep.subr.mxu0 0.0
    %392 = vmatpush1.msra.mxu0 %v167
    %393 = vmatprep.subr.mxu0 0.0
    %394 = vmatpush1.msra.mxu0 %v166
    %395 = vmatprep.subr.mxu0 0.0
    %396 = vmatpush1.msra.mxu0 %v165
    %397 = vmatprep.subr.mxu0 0.0
    %398 = vmatpush1.msra.mxu0 %v164
    %399 = vmatprep.subr.mxu0 0.0
    %400 = vmatpush1.msra.mxu0 %v163
    %401 = vmatprep.subr.mxu0 0.0
    %402 = vmatpush1.msra.mxu0 %v162
    %403 = vmatprep.subr.mxu0 0.0
    %404 = vmatpush1.msra.mxu0 %v161
    %405 = vmatprep.subr.mxu0 0.0
    %406 = vmatpush1.msra.mxu0 %v160
    %407 = vmatprep.subr.mxu0 0.0
    %408 = vmatpush1.msra.mxu0 %v159
    %409 = vmatprep.subr.mxu0 0.0
    %410 = vmatpush1.msra.mxu0 %v158
    %411 = vmatprep.subr.mxu0 0.0
    %412 = vmatpush1.msra.mxu0 %v157
    %413 = vmatprep.subr.mxu0 0.0
    %414 = vmatpush1.msra.mxu0 %v156
    %415 = vmatprep.subr.mxu0 0.0
    %416 = vmatpush1.msra.mxu0 %v155
    %417 = vmatprep.subr.mxu0 0.0
    %418 = vmatpush1.msra.mxu0 %v154
    %419 = vmatprep.subr.mxu0 0.0
    %420 = vmatpush2.msra.mxu0 0.0
    %421 = vmatprep.subr.mxu0 0.0
    %422 = vmatpush2.msra.mxu0 0.0
    %423 = vmatprep.subr.mxu0 0.0
    %424 = vmatpush2.msra.mxu0 0.0
    %425 = vmatprep.subr.mxu0 0.0
    %426 = vmatpush2.msra.mxu0 0.0
    %427 = vmatprep.subr.mxu0 0.0
    %428 = vmatpush2.msra.mxu0 0.0
    %429 = vmatprep.subr.mxu0 0.0
    %430 = vmatpush2.msra.mxu0 0.0
    %431 = vmatprep.subr.mxu0 0.0
    %432 = vmatpush2.msra.mxu0 0.0
    %433 = vmatprep.subr.mxu0 0.0
    %434 = vmatpush2.msra.mxu0 0.0
    %435 = vmatprep.subr.mxu0 0.0
    %436 = vmatpush2.msra.mxu0 0.0
    %437 = vmatprep.subr.mxu0 0.0
    %438 = vmatpush2.msra.mxu0 0.0
    %439 = vmatprep.subr.mxu0 0.0
    %440 = vmatpush2.msra.mxu0 0.0
    %441 = vmatprep.subr.mxu0 0.0
    %442 = vmatpush2.msra.mxu0 0.0
    %443 = vmatprep.subr.mxu0 0.0
    %444 = vmatpush2.msra.mxu0 0.0
    %445 = vmatprep.subr.mxu0 0.0
    %446 = vmatpush2.msra.mxu0 0.0
    %447 = vmatprep.subr.mxu0 0.0
    %448 = vmatpush2.msra.mxu0 0.0
    %449 = vmatprep.subr.mxu0 0.0
    %450 = vmatpush2.msra.mxu0 0.0
    %451 = vmatprep.mubr.f32.mxu0 0.0
    %452 = vmatmul.mubr.f32.gmra.mxu0 %v386
    %v453 = vpop.f32.mrf.mxu0
    %v454 = vadd.f32 0.0, %v453
    %v455 = vpop.f32.mrf.mxu0
    %456 = vdwg.mxu0
    %v457 = vadd.f32 %v123, %v454
    %v458 = vtanh.pop %v457
    %459 = vmatprep.subr.mxu0 0.0
    %460 = vmatpush1.msra.mxu0 %v169
    %461 = vmatprep.subr.mxu0 0.0
    %462 = vmatpush1.msra.mxu0 %v168
    %463 = vmatprep.subr.mxu0 0.0
    %464 = vmatpush1.msra.mxu0 %v167
    %465 = vmatprep.subr.mxu0 0.0
    %466 = vmatpush1.msra.mxu0 %v166
    %467 = vmatprep.subr.mxu0 0.0
    %468 = vmatpush1.msra.mxu0 %v165
    %469 = vmatprep.subr.mxu0 0.0
    %470 = vmatpush1.msra.mxu0 %v164
    %471 = vmatprep.subr.mxu0 0.0
    %472 = vmatpush1.msra.mxu0 %v163
    %473 = vmatprep.subr.mxu0 0.0
    %474 = vmatpush1.msra.mxu0 %v162
    %475 = vmatprep.subr.mxu0 0.0
    %476 = vmatpush1.msra.mxu0 %v161
    %477 = vmatprep.subr.mxu0 0.0
    %478 = vmatpush1.msra.mxu0 %v160
    %479 = vmatprep.subr.mxu0 0.0
    %480 = vmatpush1.msra.mxu0 %v159
    %481 = vmatprep.subr.mxu0 0.0
    %482 = vmatpush1.msra.mxu0 %v158
    %483 = vmatprep.subr.mxu0 0.0
    %484 = vmatpush1.msra.mxu0 %v157
    %485 = vmatprep.subr.mxu0 0.0
    %486 = vmatpush1.msra.mxu0 %v156
    %487 = vmatprep.subr.mxu0 0.0
    %488 = vmatpush1.msra.mxu0 %v155
    %489 = vmatprep.subr.mxu0 0.0
    %490 = vmatpush1.msra.mxu0 %v154
    %491 = vmatprep.subr.mxu0 0.0
    %492 = vmatpush2.msra.mxu0 0.0
    %493 = vmatprep.subr.mxu0 0.0
    %494 = vmatpush2.msra.mxu0 0.0
    %495 = vmatprep.subr.mxu0 0.0
    %496 = vmatpush2.msra.mxu0 0.0
    %497 = vmatprep.subr.mxu0 0.0
    %498 = vmatpush2.msra.mxu0 0.0
    %499 = vmatprep.subr.mxu0 0.0
    %500 = vmatpush2.msra.mxu0 0.0
    %501 = vmatprep.subr.mxu0 0.0
    %502 = vmatpush2.msra.mxu0 0.0
    %503 = vmatprep.subr.mxu0 0.0
    %504 = vmatpush2.msra.mxu0 0.0
    %505 = vmatprep.subr.mxu0 0.0
    %506 = vmatpush2.msra.mxu0 0.0
    %507 = vmatprep.subr.mxu0 0.0
    %508 = vmatpush2.msra.mxu0 0.0
    %509 = vmatprep.subr.mxu0 0.0
    %510 = vmatpush2.msra.mxu0 0.0
    %511 = vmatprep.subr.mxu0 0.0
    %512 = vmatpush2.msra.mxu0 0.0
    %513 = vmatprep.subr.mxu0 0.0
    %514 = vmatpush2.msra.mxu0 0.0
    %515 = vmatprep.subr.mxu0 0.0
    %516 = vmatpush2.msra.mxu0 0.0
    %517 = vmatprep.subr.mxu0 0.0
    %518 = vmatpush2.msra.mxu0 0.0
    %519 = vmatprep.subr.mxu0 0.0
    %520 = vmatpush2.msra.mxu0 0.0
    %521 = vmatprep.subr.mxu0 0.0
    %522 = vmatpush2.msra.mxu0 0.0
    %523 = vmatprep.mubr.f32.mxu0 0.0
    %524 = vmatmul.mubr.f32.gmra.mxu0 %v458
    %v525 = vpop.f32.mrf.mxu0
    %v526 = vadd.f32 0.0, %v525
    %v527 = vpop.f32.mrf.mxu0
    %528 = vdwg.mxu0
    %v529 = vadd.f32 %v133, %v526
    %v530 = vtanh.pop %v529
    %531 = vmatprep.subr.mxu0 0.0
    %532 = vmatpush1.msra.mxu0 %v169
    %533 = vmatprep.subr.mxu0 0.0
    %534 = vmatpush1.msra.mxu0 %v168
    %535 = vmatprep.subr.mxu0 0.0
    %536 = vmatpush1.msra.mxu0 %v167
    %537 = vmatprep.subr.mxu0 0.0
    %538 = vmatpush1.msra.mxu0 %v166
    %539 = vmatprep.subr.mxu0 0.0
    %540 = vmatpush1.msra.mxu0 %v165
    %541 = vmatprep.subr.mxu0 0.0
    %542 = vmatpush1.msra.mxu0 %v164
    %543 = vmatprep.subr.mxu0 0.0
    %544 = vmatpush1.msra.mxu0 %v163
    %545 = vmatprep.subr.mxu0 0.0
    %546 = vmatpush1.msra.mxu0 %v162
    %547 = vmatprep.subr.mxu0 0.0
    %548 = vmatpush1.msra.mxu0 %v161
    %549 = vmatprep.subr.mxu0 0.0
    %550 = vmatpush1.msra.mxu0 %v160
    %551 = vmatprep.subr.mxu0 0.0
    %552 = vmatpush1.msra.mxu0 %v159
    %553 = vmatprep.subr.mxu0 0.0
    %554 = vmatpush1.msra.mxu0 %v158
    %555 = vmatprep.subr.mxu0 0.0
    %556 = vmatpush1.msra.mxu0 %v157
    %557 = vmatprep.subr.mxu0 0.0
    %558 = vmatpush1.msra.mxu0 %v156
    %559 = vmatprep.subr.mxu0 0.0
    %560 = vmatpush1.msra.mxu0 %v155
    %561 = vmatprep.subr.mxu0 0.0
    %562 = vmatpush1.msra.mxu0 %v154
    %563 = vmatprep.subr.mxu0 0.0
    %564 = vmatpush2.msra.mxu0 0.0
    %565 = vmatprep.subr.mxu0 0.0
    %566 = vmatpush2.msra.mxu0 0.0
    %567 = vmatprep.subr.mxu0 0.0
    %568 = vmatpush2.msra.mxu0 0.0
    %569 = vmatprep.subr.mxu0 0.0
    %570 = vmatpush2.msra.mxu0 0.0
    %571 = vmatprep.subr.mxu0 0.0
    %572 = vmatpush2.msra.mxu0 0.0
    %573 = vmatprep.subr.mxu0 0.0
    %574 = vmatpush2.msra.mxu0 0.0
    %575 = vmatprep.subr.mxu0 0.0
    %576 = vmatpush2.msra.mxu0 0.0
    %577 = vmatprep.subr.mxu0 0.0
    %578 = vmatpush2.msra.mxu0 0.0
    %579 = vmatprep.subr.mxu0 0.0
    %580 = vmatpush2.msra.mxu0 0.0
    %581 = vmatprep.subr.mxu0 0.0
    %582 = vmatpush2.msra.mxu0 0.0
    %583 = vmatprep.subr.mxu0 0.0
    %584 = vmatpush2.msra.mxu0 0.0
    %585 = vmatprep.subr.mxu0 0.0
    %586 = vmatpush2.msra.mxu0 0.0
    %587 = vmatprep.subr.mxu0 0.0
    %588 = vmatpush2.msra.mxu0 0.0
    %589 = vmatprep.subr.mxu0 0.0
    %590 = vmatpush2.msra.mxu0 0.0
    %591 = vmatprep.subr.mxu0 0.0
    %592 = vmatpush2.msra.mxu0 0.0
    %593 = vmatprep.subr.mxu0 0.0
    %594 = vmatpush2.msra.mxu0 0.0
    %595 = vmatprep.mubr.f32.mxu0 0.0
    %596 = vmatmul.mubr.f32.gmra.mxu0 %v530
    %v597 = vpop.f32.mrf.mxu0
    %v598 = vadd.f32 0.0, %v597
    %v599 = vpop.f32.mrf.mxu0
    %600 = vdwg.mxu0
    %v601 = vadd.f32 %v143, %v598
    %v602 = vtanh.pop %v601
    %603 = vmatprep.subr.mxu0 0.0
    %604 = vmatpush1.msra.mxu0 %v169
    %605 = vmatprep.subr.mxu0 0.0
    %606 = vmatpush1.msra.mxu0 %v168
    %607 = vmatprep.subr.mxu0 0.0
    %608 = vmatpush1.msra.mxu0 %v167
    %609 = vmatprep.subr.mxu0 0.0
    %610 = vmatpush1.msra.mxu0 %v166
    %611 = vmatprep.subr.mxu0 0.0
    %612 = vmatpush1.msra.mxu0 %v165
    %613 = vmatprep.subr.mxu0 0.0
    %614 = vmatpush1.msra.mxu0 %v164
    %615 = vmatprep.subr.mxu0 0.0
    %616 = vmatpush1.msra.mxu0 %v163
    %617 = vmatprep.subr.mxu0 0.0
    %618 = vmatpush1.msra.mxu0 %v162
    %619 = vmatprep.subr.mxu0 0.0
    %620 = vmatpush1.msra.mxu0 %v161
    %621 = vmatprep.subr.mxu0 0.0
    %622 = vmatpush1.msra.mxu0 %v160
    %623 = vmatprep.subr.mxu0 0.0
    %624 = vmatpush1.msra.mxu0 %v159
    %625 = vmatprep.subr.mxu0 0.0
    %626 = vmatpush1.msra.mxu0 %v158
    %627 = vmatprep.subr.mxu0 0.0
    %628 = vmatpush1.msra.mxu0 %v157
    %629 = vmatprep.subr.mxu0 0.0
    %630 = vmatpush1.msra.mxu0 %v156
    %631 = vmatprep.subr.mxu0 0.0
    %632 = vmatpush1.msra.mxu0 %v155
    %633 = vmatprep.subr.mxu0 0.0
    %634 = vmatpush1.msra.mxu0 %v154
    %635 = vmatprep.subr.mxu0 0.0
    %636 = vmatpush2.msra.mxu0 0.0
    %637 = vmatprep.subr.mxu0 0.0
    %638 = vmatpush2.msra.mxu0 0.0
    %639 = vmatprep.subr.mxu0 0.0
    %640 = vmatpush2.msra.mxu0 0.0
    %641 = vmatprep.subr.mxu0 0.0
    %642 = vmatpush2.msra.mxu0 0.0
    %643 = vmatprep.subr.mxu0 0.0
    %644 = vmatpush2.msra.mxu0 0.0
    %645 = vmatprep.subr.mxu0 0.0
    %646 = vmatpush2.msra.mxu0 0.0
    %647 = vmatprep.subr.mxu0 0.0
    %648 = vmatpush2.msra.mxu0 0.0
    %649 = vmatprep.subr.mxu0 0.0
    %650 = vmatpush2.msra.mxu0 0.0
    %651 = vmatprep.subr.mxu0 0.0
    %652 = vmatpush2.msra.mxu0 0.0
    %653 = vmatprep.subr.mxu0 0.0
    %654 = vmatpush2.msra.mxu0 0.0
    %655 = vmatprep.subr.mxu0 0.0
    %656 = vmatpush2.msra.mxu0 0.0
    %657 = vmatprep.subr.mxu0 0.0
    %658 = vmatpush2.msra.mxu0 0.0
    %659 = vmatprep.subr.mxu0 0.0
    %660 = vmatpush2.msra.mxu0 0.0
    %661 = vmatprep.subr.mxu0 0.0
    %662 = vmatpush2.msra.mxu0 0.0
    %663 = vmatprep.subr.mxu0 0.0
    %664 = vmatpush2.msra.mxu0 0.0
    %665 = vmatprep.subr.mxu0 0.0
    %666 = vmatpush2.msra.mxu0 0.0
    %667 = vmatprep.mubr.f32.mxu0 0.0
    %668 = vmatmul.mubr.f32.gmra.mxu0 %v602
    %v669 = vpop.f32.mrf.mxu0
    %v670 = vadd.f32 0.0, %v669
    %v671 = vpop.f32.mrf.mxu0
    %672 = vdwg.mxu0
    %v673 = vadd.f32 %v153, %v670
    %v674 = vtanh.pop %v673
    %v677 = vunpack.c.l.s4 1966171168
    %v678 = vunpack.c.0.s8 %v677
    %v679 = vlaneseq
    %v680 = vshrl.u32 %v679, 7
    %v681 = vsub.s32 %v678, %v680
    %v682 = vrot.slane %v170, %v681
    %v683 = vcombine.high %v682, %v682
    %v685 = vunpack.c.l.s4 1966171168
    %v686 = vunpack.c.0.s8 %v685
    %v687 = vlaneseq
    %v688 = vshrl.u32 %v687, 7
    %v689 = vsub.s32 %v686, %v688
    %v690 = vrot.slane %v682, %v689
    %v692 = vunpack.c.l.s4 1966171168
    %v693 = vunpack.c.0.s8 %v692
    %v694 = vlaneseq
    %v695 = vshrl.u32 %v694, 7
    %v696 = vsub.s32 %v693, %v695
    %v697 = vrot.slane %v683, %v696
    %v702 = vunpack.c.l.s4 1966171168
    %v703 = vunpack.c.0.s8 %v702
    %v704 = vlaneseq
    %v705 = vshrl.u32 %v704, 7
    %v706 = vsub.s32 %v703, %v705
    %v707 = vrot.slane %v242, %v706
    %v708 = vcombine.high %v707, %v707
    %v710 = vunpack.c.l.s4 1966171168
    %v711 = vunpack.c.0.s8 %v710
    %v712 = vlaneseq
    %v713 = vshrl.u32 %v712, 7
    %v714 = vsub.s32 %v711, %v713
    %v715 = vrot.slane %v707, %v714
    %v717 = vunpack.c.l.s4 1966171168
    %v718 = vunpack.c.0.s8 %v717
    %v719 = vlaneseq
    %v720 = vshrl.u32 %v719, 7
    %v721 = vsub.s32 %v718, %v720
    %v722 = vrot.slane %v708, %v721
    %v725 = vunpack.c.l.s4 1966171168
    %v726 = vunpack.c.0.s8 %v725
    %v727 = vlaneseq
    %v728 = vshrl.u32 %v727, 7
    %v729 = vsub.s32 %v726, %v728
    %v730 = vrot.slane %v314, %v729
    %v731 = vcombine.high %v730, %v730
    %v733 = vunpack.c.l.s4 1966171168
    %v734 = vunpack.c.0.s8 %v733
    %v735 = vlaneseq
    %v736 = vshrl.u32 %v735, 7
    %v737 = vsub.s32 %v734, %v736
    %v738 = vrot.slane %v730, %v737
    %v740 = vunpack.c.l.s4 1966171168
    %v741 = vunpack.c.0.s8 %v740
    %v742 = vlaneseq
    %v743 = vshrl.u32 %v742, 7
    %v744 = vsub.s32 %v741, %v743
    %v745 = vrot.slane %v731, %v744
    %v748 = vunpack.c.l.s4 1966171168
    %v749 = vunpack.c.0.s8 %v748
    %v750 = vlaneseq
    %v751 = vshrl.u32 %v750, 7
    %v752 = vsub.s32 %v749, %v751
    %v753 = vrot.slane %v386, %v752
    %v754 = vcombine.high %v753, %v753
    %v756 = vunpack.c.l.s4 1966171168
    %v757 = vunpack.c.0.s8 %v756
    %v758 = vlaneseq
    %v759 = vshrl.u32 %v758, 7
    %v760 = vsub.s32 %v757, %v759
    %v761 = vrot.slane %v753, %v760
    %v763 = vunpack.c.l.s4 1966171168
    %v764 = vunpack.c.0.s8 %v763
    %v765 = vlaneseq
    %v766 = vshrl.u32 %v765, 7
    %v767 = vsub.s32 %v764, %v766
    %v768 = vrot.slane %v754, %v767
    %v771 = vunpack.c.l.s4 1966171168
    %v772 = vunpack.c.0.s8 %v771
    %v773 = vlaneseq
    %v774 = vshrl.u32 %v773, 7
    %v775 = vsub.s32 %v772, %v774
    %v776 = vrot.slane %v458, %v775
    %v777 = vcombine.high %v776, %v776
    %v779 = vunpack.c.l.s4 1966171168
    %v780 = vunpack.c.0.s8 %v779
    %v781 = vlaneseq
    %v782 = vshrl.u32 %v781, 7
    %v783 = vsub.s32 %v780, %v782
    %v784 = vrot.slane %v776, %v783
    %v786 = vunpack.c.l.s4 1966171168
    %v787 = vunpack.c.0.s8 %v786
    %v788 = vlaneseq
    %v789 = vshrl.u32 %v788, 7
    %v790 = vsub.s32 %v787, %v789
    %v791 = vrot.slane %v777, %v790
    %v794 = vunpack.c.l.s4 1966171168
    %v795 = vunpack.c.0.s8 %v794
    %v796 = vlaneseq
    %v797 = vshrl.u32 %v796, 7
    %v798 = vsub.s32 %v795, %v797
    %v799 = vrot.slane %v530, %v798
    %v800 = vcombine.high %v799, %v799
    %v802 = vunpack.c.l.s4 1966171168
    %v803 = vunpack.c.0.s8 %v802
    %v804 = vlaneseq
    %v805 = vshrl.u32 %v804, 7
    %v806 = vsub.s32 %v803, %v805
    %v807 = vrot.slane %v799, %v806
    %v809 = vunpack.c.l.s4 1966171168
    %v810 = vunpack.c.0.s8 %v809
    %v811 = vlaneseq
    %v812 = vshrl.u32 %v811, 7
    %v813 = vsub.s32 %v810, %v812
    %v814 = vrot.slane %v800, %v813
    %v817 = vunpack.c.l.s4 1966171168
    %v818 = vunpack.c.0.s8 %v817
    %v819 = vlaneseq
    %v820 = vshrl.u32 %v819, 7
    %v821 = vsub.s32 %v818, %v820
    %v822 = vrot.slane %v602, %v821
    %v823 = vcombine.high %v822, %v822
    %v825 = vunpack.c.l.s4 1966171168
    %v826 = vunpack.c.0.s8 %v825
    %v827 = vlaneseq
    %v828 = vshrl.u32 %v827, 7
    %v829 = vsub.s32 %v826, %v828
    %v830 = vrot.slane %v822, %v829
    %v832 = vunpack.c.l.s4 1966171168
    %v833 = vunpack.c.0.s8 %v832
    %v834 = vlaneseq
    %v835 = vshrl.u32 %v834, 7
    %v836 = vsub.s32 %v833, %v835
    %v837 = vrot.slane %v823, %v836
    %v840 = vunpack.c.l.s4 1966171168
    %v841 = vunpack.c.0.s8 %v840
    %v842 = vlaneseq
    %v843 = vshrl.u32 %v842, 7
    %v844 = vsub.s32 %v841, %v843
    %v845 = vrot.slane %v674, %v844
    %v846 = vcombine.high %v845, %v845
    %v848 = vunpack.c.l.s4 1966171168
    %v849 = vunpack.c.0.s8 %v848
    %v850 = vlaneseq
    %v851 = vshrl.u32 %v850, 7
    %v852 = vsub.s32 %v849, %v851
    %v853 = vrot.slane %v845, %v852
    %v855 = vunpack.c.l.s4 1966171168
    %v856 = vunpack.c.0.s8 %v855
    %v857 = vlaneseq
    %v858 = vshrl.u32 %v857, 7
    %v859 = vsub.s32 %v856, %v858
    %v860 = vrot.slane %v846, %v859
    %v861 = vlaneseq
    %v862 = vshrl.u32 %v861, 7
    %v863 = vsub.s32 0, %v862
    %v864 = vrot.slane %v715, %v863
    %v865 = vlaneseq
    %v866 = vshrl.u32 %v865, 7
    %v867 = vsub.s32 0, %v866
    %v868 = vrot.slane %v722, %v867
    %v871 = vlaneseq
    %v872 = vshrl.u32 %v871, 7
    %v873 = vsub.s32 0, %v872
    %v874 = vrot.slane %v738, %v873
    %v875 = vlaneseq
    %v876 = vshrl.u32 %v875, 7
    %v877 = vsub.s32 0, %v876
    %v878 = vrot.slane %v745, %v877
    %v881 = vlaneseq
    %v882 = vshrl.u32 %v881, 7
    %v883 = vsub.s32 0, %v882
    %v884 = vrot.slane %v761, %v883
    %v885 = vlaneseq
    %v886 = vshrl.u32 %v885, 7
    %v887 = vsub.s32 0, %v886
    %v888 = vrot.slane %v768, %v887
    %v891 = vlaneseq
    %v892 = vshrl.u32 %v891, 7
    %v893 = vsub.s32 0, %v892
    %v894 = vrot.slane %v784, %v893
    %v895 = vlaneseq
    %v896 = vshrl.u32 %v895, 7
    %v897 = vsub.s32 0, %v896
    %v898 = vrot.slane %v791, %v897
    %v901 = vlaneseq
    %v902 = vshrl.u32 %v901, 7
    %v903 = vsub.s32 0, %v902
    %v904 = vrot.slane %v807, %v903
    %v905 = vlaneseq
    %v906 = vshrl.u32 %v905, 7
    %v907 = vsub.s32 0, %v906
    %v908 = vrot.slane %v814, %v907
    %v911 = vlaneseq
    %v912 = vshrl.u32 %v911, 7
    %v913 = vsub.s32 0, %v912
    %v914 = vrot.slane %v830, %v913
    %v915 = vlaneseq
    %v916 = vshrl.u32 %v915, 7
    %v917 = vsub.s32 0, %v916
    %v918 = vrot.slane %v837, %v917
    %v921 = vlaneseq
    %v922 = vshrl.u32 %v921, 7
    %v923 = vsub.s32 0, %v922
    %v924 = vrot.slane %v853, %v923
    %v925 = vlaneseq
    %v926 = vshrl.u32 %v925, 7
    %v927 = vsub.s32 0, %v926
    %v928 = vrot.slane %v860, %v927
    %v931 = vsel %vm82, %v690, %v864
    %v932 = vsel %vm82, %v697, %v868
    %vm933 = vcmask 1041408
    %v934 = vsel %vm933, %v931, %v874
    %v935 = vsel %vm933, %v932, %v878
    %vm936 = vcmask 1042432
    %v937 = vsel %vm936, %v934, %v884
    %v938 = vsel %vm936, %v935, %v888
    %vm939 = vcmask 1043456
    %v940 = vsel %vm939, %v937, %v894
    %v941 = vsel %vm939, %v938, %v898
    %vm942 = vcmask 1044480
    %v943 = vsel %vm942, %v940, %v904
    %v944 = vsel %vm942, %v941, %v908
    %vm945 = vcmask 1045504
    %v946 = vsel %vm945, %v943, %v914
    %v947 = vsel %vm945, %v944, %v918
    %vm948 = vcmask 1046528
    %v949 = vsel %vm948, %v946, %v924
    %v950 = vsel %vm948, %v947, %v928
    %v951 = vld [vmem:[#allocation9] sm:$0xff]
    %v952 = vld [vmem:[#allocation9 + $0x8] sm:$0xff]
    %v953 = vld [vmem:[#allocation9 + $0x10] sm:$0xff]
    %v954 = vld [vmem:[#allocation9 + $0x18] sm:$0xff]
    %v955 = vld [vmem:[#allocation9 + $0x20] sm:$0xff]
    %v956 = vld [vmem:[#allocation9 + $0x28] sm:$0xff]
    %v957 = vld [vmem:[#allocation9 + $0x30] sm:$0xff]
    %v958 = vld [vmem:[#allocation9 + $0x38] sm:$0xff]
    %v959 = vld [vmem:[#allocation9 + $0x40] sm:$0xff]
    %v960 = vld [vmem:[#allocation9 + $0x48] sm:$0xff]
    %v961 = vld [vmem:[#allocation9 + $0x50] sm:$0xff]
    %v962 = vld [vmem:[#allocation9 + $0x58] sm:$0xff]
    %v963 = vld [vmem:[#allocation9 + $0x60] sm:$0xff]
    %v964 = vld [vmem:[#allocation9 + $0x68] sm:$0xff]
    %v965 = vld [vmem:[#allocation9 + $0x70] sm:$0xff]
    %v966 = vld [vmem:[#allocation9 + $0x78] sm:$0xff]
    %v967 = vld [vmem:[%s4] sm:$0x1]
    %v969 = vlaneseq
    %v970 = vshrl.u32 %v969, 7
    %v971 = vsub.s32 0, %v970
    %v972 = vrot.slane %v967, %v971
    %974 = vmatprep.subr.mxu0 0.0
    %975 = vmatpush1.msra.mxu0 %v966
    %976 = vmatprep.subr.mxu0 0.0
    %977 = vmatpush1.msra.mxu0 %v965
    %978 = vmatprep.subr.mxu0 0.0
    %979 = vmatpush1.msra.mxu0 %v964
    %980 = vmatprep.subr.mxu0 0.0
    %981 = vmatpush1.msra.mxu0 %v963
    %982 = vmatprep.subr.mxu0 0.0
    %983 = vmatpush1.msra.mxu0 %v962
    %984 = vmatprep.subr.mxu0 0.0
    %985 = vmatpush1.msra.mxu0 %v961
    %986 = vmatprep.subr.mxu0 0.0
    %987 = vmatpush1.msra.mxu0 %v960
    %988 = vmatprep.subr.mxu0 0.0
    %989 = vmatpush1.msra.mxu0 %v959
    %990 = vmatprep.subr.mxu0 0.0
    %991 = vmatpush1.msra.mxu0 %v958
    %992 = vmatprep.subr.mxu0 0.0
    %993 = vmatpush1.msra.mxu0 %v957
    %994 = vmatprep.subr.mxu0 0.0
    %995 = vmatpush1.msra.mxu0 %v956
    %996 = vmatprep.subr.mxu0 0.0
    %997 = vmatpush1.msra.mxu0 %v955
    %998 = vmatprep.subr.mxu0 0.0
    %999 = vmatpush1.msra.mxu0 %v954
    %1000 = vmatprep.subr.mxu0 0.0
    %1001 = vmatpush1.msra.mxu0 %v953
    %1002 = vmatprep.subr.mxu0 0.0
    %1003 = vmatpush1.msra.mxu0 %v952
    %1004 = vmatprep.subr.mxu0 0.0
    %1005 = vmatpush1.msra.mxu0 %v951
    %1006 = vmatprep.subr.mxu0 0.0
    %1007 = vmatpush2.msra.mxu0 0.0
    %1008 = vmatprep.subr.mxu0 0.0
    %1009 = vmatpush2.msra.mxu0 0.0
    %1010 = vmatprep.subr.mxu0 0.0
    %1011 = vmatpush2.msra.mxu0 0.0
    %1012 = vmatprep.subr.mxu0 0.0
    %1013 = vmatpush2.msra.mxu0 0.0
    %1014 = vmatprep.subr.mxu0 0.0
    %1015 = vmatpush2.msra.mxu0 0.0
    %1016 = vmatprep.subr.mxu0 0.0
    %1017 = vmatpush2.msra.mxu0 0.0
    %1018 = vmatprep.subr.mxu0 0.0
    %1019 = vmatpush2.msra.mxu0 0.0
    %1020 = vmatprep.subr.mxu0 0.0
    %1021 = vmatpush2.msra.mxu0 0.0
    %1022 = vmatprep.subr.mxu0 0.0
    %1023 = vmatpush2.msra.mxu0 0.0
    %1024 = vmatprep.subr.mxu0 0.0
    %1025 = vmatpush2.msra.mxu0 0.0
    %1026 = vmatprep.subr.mxu0 0.0
    %1027 = vmatpush2.msra.mxu0 0.0
    %1028 = vmatprep.subr.mxu0 0.0
    %1029 = vmatpush2.msra.mxu0 0.0
    %1030 = vmatprep.subr.mxu0 0.0
    %1031 = vmatpush2.msra.mxu0 0.0
    %1032 = vmatprep.subr.mxu0 0.0
    %1033 = vmatpush2.msra.mxu0 0.0
    %1034 = vmatprep.subr.mxu0 0.0
    %1035 = vmatpush2.msra.mxu0 0.0
    %1036 = vmatprep.subr.mxu0 0.0
    %1037 = vmatpush2.msra.mxu0 0.0
    %1038 = vmatprep.mubr.f32.mxu0 0.0
    %1039 = vmatmul.mubr.f32.gmra.mxu0 %v949
    %v1040 = vpop.f32.mrf.mxu0
    %v1041 = vadd.f32 %v972, %v1040
    %v1042 = vpop.f32.mrf.mxu0
    %1043 = vmatprep.mubr.f32.mxu0 0.0
    %1044 = vmatmul.mubr.f32.gmra.mxu0 %v950
    %v1045 = vpop.f32.mrf.mxu0
    %v1046 = vadd.f32 %v972, %v1045
    %v1047 = vpop.f32.mrf.mxu0
    %1048 = vdwg.mxu0
    %1049 = vst [vmem:[#allocation10] sm:$0xff] %v1041
    %1050 = vst [vmem:[#allocation10 + $0x8] sm:$0xff] %v1046
    // Predicated region
    $region38: #{rnn_model_forward.1} parent=1 // pred_check
      _
    $region39: #{rnn_model_forward.1} parent=1 // pred_check_branch
      %1052 = sbr.rel (0) target = $region41
    $region40: #{rnn_model_forward.1} parent=1 // pred_region
      %s1054 = ssub.s32 256, 256
      %1055 = vsyncadd [#allocation4], %s1054
      %s1056 = sshll.u32 [#allocation10], 4
      %s1057 = int_to_ptr.vmem [resolvable:$true] %s1056
      %1062 = dma.vmem_to_hbm [thread:$0]  %s1057, 256, %s5, [#allocation4], 128, 128, 8
    $region41: #{rnn_model_forward.1} parent=1 // pred_fallthru
      _
    // Predicated region
    $region42: #{rnn_model_forward.1} parent=1 // pred_check
      _
    $region43: #{rnn_model_forward.1} parent=1 // pred_check_branch
      %1064 = sbr.rel (0) target = $region45
    $region44: #{rnn_model_forward.1} parent=1 // pred_region
      %1065 = dma.done [#allocation4], 256
    $region45: #{rnn_model_forward.1} parent=1 // pred_fallthru
      _
    %1066 = vsyncpa [#allocation3], 1
    %1067 = vsyncpa [#allocation8], 1
    %1068 = vsyncpa [#allocation4], 1
    %1069 = vsyncpa [#allocation5], 1

</llo_original>
